<compile_context>
chip_gen: v5e
topology: v5e:2x2
jax: 0.10.0
libtpu: 0.0.40
codegen_flags: <defaults>
</compile_context>

<pallas_src>
import math

import jax
import jax.numpy as jnp
from jax.experimental import pallas as pl
from jax.experimental.pallas import tpu as pltpu


def _round_up(a, b):
    return ((a + b - 1) // b) * b


def _make_kernel(c_col, k_tile, y_resident):
    """c_col: lane index of the all-ones 'degree' column inside Y/output."""

    def kernel(a_ref, y_ref, z_ref, o_ref):
        k = pl.program_id(1)

        @pl.when(k == 0)
        def _():
            o_ref[...] = jnp.zeros_like(o_ref)

        a = a_ref[...]
        if a.dtype != jnp.bfloat16:
            a = a.astype(jnp.bfloat16)          # 0/1 adjacency: exact in bf16

        if y_resident:
            off = pl.multiple_of(k * k_tile, 128)
            y = y_ref[pl.ds(off, k_tile), :]    # slice the resident Y copy
        else:
            y = y_ref[...]

        # bf16 x bf16 MXU matmul with f32 accumulation directly into the
        # resident output block.  Column c_col of Y is all-ones, so column
        # c_col of the accumulator collects each row's (exact) degree.
        o_ref[...] += jnp.dot(a, y, preferred_element_type=jnp.float32)

        @pl.when(k == pl.num_programs(1) - 1)
        def _():
            acc = o_ref[...]
            lane = jax.lax.broadcasted_iota(jnp.int32, acc.shape, 1)
            deg = jnp.sum(jnp.where(lane == c_col, acc, 0.0),
                          axis=-1, keepdims=True)
            # deg == 0 (isolated node) -> mean term 0, matching scatter_mean.
            inv_deg = pl.reciprocal(jnp.maximum(deg, 1.0), approx=True)
            o_ref[...] = jnp.maximum(acc * inv_deg + z_ref[...], 0.0)  # ReLU

    return kernel


def graphsage1_forward(x, adj, w_l, w_r, b_l, *, tile_n=512, k_tile=512):
    """relu(SAGEConv(mean)(x, adj)).

    x: [N, F] f32; adj: [N, N] dense 0/1 (f32 or bf16); w_l/w_r: [F, C];
    b_l: [C] or [1, C].  Returns [N, C] f32.
    """
    N, F_in = x.shape
    C = w_l.shape[1]
    assert adj.shape == (N, N)
    b_l = jnp.reshape(b_l, (1, C)).astype(jnp.float32)

    # ---- geometry -----------------------------------------------------------
    n128 = _round_up(N, 128)
    tile_n = max(128, min(_round_up(tile_n, 128), n128))
    k_tile = max(128, min(_round_up(k_tile, 128), n128))
    # Keep >= 2 row tiles when possible so the "parallel" grid axis can shard
    # across both v7x TensorCores.
    if tile_n >= n128 and n128 >= 256 and (n128 // 2) % 128 == 0:
        tile_n = n128 // 2
    # Pad N so both tile sizes divide it (both are multiples of 128).
    N_pad = _round_up(n128, (tile_n * k_tile) // math.gcd(tile_n, k_tile))

    # Lane-dense padded output width; one spare lane (column C) carries the
    # all-ones "degree" column through the matmul.  (If C were already a
    # multiple of 128 this costs one extra 128-lane block.)
    C_pad = _round_up(C + 1, 128)

    # ---- small precomputations (O(N*F + N*C), tiny vs. the N^2 stream) ------
    xf = x.astype(jnp.float32)
    w_l_p = jnp.zeros((F_in, C_pad), jnp.float32).at[:, :C].set(
        w_l.astype(jnp.float32))
    w_r_p = jnp.zeros((F_in, C_pad), jnp.float32).at[:, :C].set(
        w_r.astype(jnp.float32))
    b_l_p = jnp.zeros((1, C_pad), jnp.float32).at[:, :C].set(b_l)

    y = (xf @ w_l_p).astype(jnp.bfloat16)      # neighbor transform (bf16 MXU operand)
    y = y.at[:, C].set(jnp.bfloat16(1.0))      # degree column rides the matmul
    z = xf @ w_r_p + b_l_p                     # self transform + bias (f32)

    if N_pad != N:
        adj = jnp.zeros((N_pad, N_pad), adj.dtype).at[:N, :N].set(adj)
        y = jnp.zeros((N_pad, C_pad), y.dtype).at[:N].set(y)
        z = jnp.zeros((N_pad, C_pad), z.dtype).at[:N].set(z)

    # ---- Y residency + VMEM budget ------------------------------------------
    y_resident = (N_pad * C_pad * 2) <= (8 << 20)   # DMA Y once if it fits
    a_elt = 2 if adj.dtype == jnp.bfloat16 else 4
    y_blk_bytes = (N_pad if y_resident else k_tile) * C_pad * 2
    vmem_need = (2 * tile_n * k_tile * a_elt        # adjacency (double-buffered)
                 + 2 * y_blk_bytes                  # Y (conservative x2)
                 + 2 * tile_n * C_pad * 4           # Z
                 + 2 * tile_n * C_pad * 4)          # resident output block
    vmem_limit = int(min(48 << 20,
                         max(int(1.5 * vmem_need) + (2 << 20), 16 << 20)))

    grid = (N_pad // tile_n, N_pad // k_tile)
    if y_resident:
        y_spec = pl.BlockSpec((N_pad, C_pad), lambda i, k: (0, 0))
    else:
        y_spec = pl.BlockSpec((k_tile, C_pad), lambda i, k: (k, 0))

    out_pad = pl.pallas_call(
        _make_kernel(C, k_tile, y_resident),
        out_shape=jax.ShapeDtypeStruct((N_pad, C_pad), jnp.float32),
        grid_spec=pltpu.PrefetchScalarGridSpec(
            num_scalar_prefetch=0,
            grid=grid,
            in_specs=[
                pl.BlockSpec((tile_n, k_tile), lambda i, k: (i, k)),   # A tile
                y_spec,                                                # Y
                pl.BlockSpec((tile_n, C_pad), lambda i, k: (i, 0)),    # Z tile
            ],
            out_specs=pl.BlockSpec((tile_n, C_pad), lambda i, k: (i, 0)),
        ),
        compiler_params=pltpu.CompilerParams(
            dimension_semantics=("parallel", "arbitrary"),
            vmem_limit_bytes=vmem_limit,
        ),
    )(adj, y, z)

    return out_pad[:N, :C]


if __name__ == "__main__":
    # GraphSAGE1(nfeat, nhid, nclass, dropout): forward only uses
    # conv1 = SAGEConv(nfeat, nclass) followed by ReLU.
    N, nfeat, nclass = 256, 32, 16

    key = jax.random.PRNGKey(0)
    kx, ka, kwl, kwr, kb = jax.random.split(key, 5)

    x = jax.random.normal(kx, (N, nfeat), dtype=jnp.float32)
    adj = (jax.random.uniform(ka, (N, N)) < 0.05).astype(jnp.float32)

    scale = (2.0 / (nfeat + nclass)) ** 0.5
    w_l = scale * jax.random.normal(kwl, (nfeat, nclass), dtype=jnp.float32)
    w_r = scale * jax.random.normal(kwr, (nfeat, nclass), dtype=jnp.float32)
    b_l = 0.01 * jax.random.normal(kb, (1, nclass), dtype=jnp.float32)

    # Small tiles so the (2, 2) grid exercises both pipeline axes.
    out = graphsage1_forward(x, adj, w_l, w_r, b_l, tile_n=128, k_tile=128)
    out = jax.block_until_ready(out)
    assert out.shape == (N, nclass)

    deg = adj.sum(-1, keepdims=True)
    inv_deg = 1.0 / jnp.maximum(deg, 1.0)

    # Reassociated reference using the same bf16-rounded Y as the kernel
    # (remaining deltas: accumulation order + approx reciprocal + padding).
    y_bf16 = (x @ w_l).astype(jnp.bfloat16).astype(jnp.float32)
    ref_bf16 = jax.nn.relu((adj @ y_bf16) * inv_deg + (x @ w_r + b_l))
    assert jnp.allclose(out, ref_bf16, atol=1e-2, rtol=1e-2), \
        float(jnp.max(jnp.abs(out - ref_bf16)))

    # Canonical SAGEConv(mean) formula (looser: bf16 Y rounding ~0.4% rel).
    ref_canon = jax.nn.relu((adj @ x) * inv_deg @ w_l + b_l + x @ w_r)
    assert jnp.allclose(out, ref_canon, atol=5e-2, rtol=5e-2), \
        float(jnp.max(jnp.abs(out - ref_canon)))

    print("KERNEL_OK")
</pallas_src>

<mosaic_0001>
module attributes {stable_mosaic.version = 11 : i64} {
  func.func @kernel(%arg0: i32, %arg1: i32, %arg2: memref<128x128xf32, #tpu.memory_space<vmem>>, %arg3: memref<256x128xbf16, #tpu.memory_space<vmem>>, %arg4: memref<128x128xf32, #tpu.memory_space<vmem>>, %arg5: memref<128x128xf32, #tpu.memory_space<vmem>>) attributes {dimension_semantics = [#tpu.dimension_semantics<parallel>, #tpu.dimension_semantics<arbitrary>], iteration_bounds = array<i64: 2, 2>, scalar_prefetch = 0 : i64, scratch_operands = 0 : i64, tpu.core_type = #tpu.core_type<tc>, window_params = [{transform_indices = @transform_0, window_bounds = array<i64: 128, 128>}, {pipeline_mode = #tpu.pipeline_mode<synchronous>, transform_indices = @transform_1, window_bounds = array<i64: 256, 128>}, {transform_indices = @transform_2, window_bounds = array<i64: 128, 128>}, {transform_indices = @transform_3, window_bounds = array<i64: 128, 128>}]} {
    %c0_i32 = arith.constant 0 : i32
    %0 = arith.cmpi eq, %arg1, %c0_i32 : i32
    %1 = arith.extui %0 : i1 to i32
    %c0_i32_0 = arith.constant 0 : i32
    %2 = arith.cmpi ne, %1, %c0_i32_0 : i32
    scf.if %2 {
      %cst_8 = arith.constant 0.000000e+00 : f32
      %16 = vector.broadcast %cst_8 : f32 to vector<128x128xf32>
      %c0_9 = arith.constant 0 : index
      %c0_10 = arith.constant 0 : index
      %17 = vector.load %arg5[%c0_9, %c0_10] : memref<128x128xf32, #tpu.memory_space<vmem>>, vector<128x128xf32>
      tpu.vector_store %arg5[%c0_9, %c0_10], %16 {strides = array<i32>} : memref<128x128xf32, #tpu.memory_space<vmem>>, vector<128x128xf32>,
    } else {
    }
    %c0 = arith.constant 0 : index
    %c0_1 = arith.constant 0 : index
    %3 = vector.load %arg2[%c0, %c0_1] : memref<128x128xf32, #tpu.memory_space<vmem>>, vector<128x128xf32>
    %4 = arith.truncf %3 : vector<128x128xf32> to vector<128x128xbf16>
    %c128_i32 = arith.constant 128 : i32
    %5 = arith.muli %arg1, %c128_i32 : i32
    %6 = tpu.assume_multiple %5, 128 : i32
    %7 = arith.index_cast %6 : i32 to index
    %c0_2 = arith.constant 0 : index
    %8 = vector.load %arg3[%7, %c0_2] : memref<256x128xbf16, #tpu.memory_space<vmem>>, vector<128x128xbf16>
    %c0_3 = arith.constant 0 : index
    %c0_4 = arith.constant 0 : index
    %9 = vector.load %arg5[%c0_3, %c0_4] : memref<128x128xf32, #tpu.memory_space<vmem>>, vector<128x128xf32>
    %cst = arith.constant dense<0.000000e+00> : vector<128x128xf32>
    %10 = tpu.matmul %4, %8, %cst {dimension_numbers = #tpu.dot_dimension_numbers<[1], [0], [0], [1], [0, 0, 1, 1], [], []>} : vector<128x128xbf16>, vector<128x128xbf16>, vector<128x128xf32> -> vector<128x128xf32>
    %11 = arith.addf %9, %10 : vector<128x128xf32>
    %c0_5 = arith.constant 0 : index
    %c0_6 = arith.constant 0 : index
    %12 = vector.load %arg5[%c0_5, %c0_6] : memref<128x128xf32, #tpu.memory_space<vmem>>, vector<128x128xf32>
    tpu.vector_store %arg5[%c0_5, %c0_6], %11 {strides = array<i32>} : memref<128x128xf32, #tpu.memory_space<vmem>>, vector<128x128xf32>,
    %c1_i32 = arith.constant 1 : i32
    %13 = arith.cmpi eq, %arg1, %c1_i32 : i32
    %14 = arith.extui %13 : i1 to i32
    %c0_i32_7 = arith.constant 0 : i32
    %15 = arith.cmpi ne, %14, %c0_i32_7 : i32
    scf.if %15 {
      %c0_8 = arith.constant 0 : index
      %c0_9 = arith.constant 0 : index
      %16 = vector.load %arg5[%c0_8, %c0_9] : memref<128x128xf32, #tpu.memory_space<vmem>>, vector<128x128xf32>
      %17 = tpu.iota {dimensions = array<i32: 1>} : vector<128x128xi32>
      %c16_i32 = arith.constant 16 : i32
      %18 = vector.broadcast %c16_i32 : i32 to vector<128x128xi32>
      %19 = arith.cmpi eq, %17, %18 : vector<128x128xi32>
      %cst_10 = arith.constant 0.000000e+00 : f32
      %20 = vector.broadcast %cst_10 : f32 to vector<128x128xf32>
      %21 = arith.select %19, %16, %20 : vector<128x128xi1>, vector<128x128xf32>
      %cst_11 = arith.constant dense<0.000000e+00> : vector<128xf32>
      %22 = vector.multi_reduction <add>, %21, %cst_11 [1] : vector<128x128xf32> to vector<128xf32>
      %23 = vector.shape_cast %22 : vector<128xf32> to vector<128x1xf32>
      %cst_12 = arith.constant 1.000000e+00 : f32
      %24 = vector.broadcast %cst_12 : f32 to vector<128x1xf32>
      %25 = arith.maximumf %23, %24 : vector<128x1xf32>
      %26 = tpu.reciprocal %25 {approx = true} : vector<128x1xf32> -> vector<128x1xf32>
      %27 = vector.broadcast %26 : vector<128x1xf32> to vector<128x128xf32>
      %28 = arith.mulf %16, %27 : vector<128x128xf32>
      %c0_13 = arith.constant 0 : index
      %c0_14 = arith.constant 0 : index
      %29 = vector.load %arg4[%c0_13, %c0_14] : memref<128x128xf32, #tpu.memory_space<vmem>>, vector<128x128xf32>
      %30 = arith.addf %28, %29 : vector<128x128xf32>
      %cst_15 = arith.constant 0.000000e+00 : f32
      %31 = vector.broadcast %cst_15 : f32 to vector<128x128xf32>
      %32 = arith.maximumf %30, %31 : vector<128x128xf32>
      %c0_16 = arith.constant 0 : index
      %c0_17 = arith.constant 0 : index
      %33 = vector.load %arg5[%c0_16, %c0_17] : memref<128x128xf32, #tpu.memory_space<vmem>>, vector<128x128xf32>
      tpu.vector_store %arg5[%c0_16, %c0_17], %32 {strides = array<i32>} : memref<128x128xf32, #tpu.memory_space<vmem>>, vector<128x128xf32>,
    } else {
    }
    return
  }
  func.func @transform_0(%arg0: i32, %arg1: i32) -> (i32, i32) {
    %c0_i32 = arith.constant 0 : i32
    return %arg0, %arg1 : i32, i32
  }
  func.func @transform_1(%arg0: i32, %arg1: i32) -> (i32, i32) {
    %c0_i32 = arith.constant 0 : i32
    %c0_i32_0 = arith.constant 0 : i32
    %c0_i32_1 = arith.constant 0 : i32
    return %c0_i32, %c0_i32_0 : i32, i32
  }
  func.func @transform_2(%arg0: i32, %arg1: i32) -> (i32, i32) {
    %c0_i32 = arith.constant 0 : i32
    %c0_i32_0 = arith.constant 0 : i32
    return %arg0, %c0_i32 : i32, i32
  }
  func.func @transform_3(%arg0: i32, %arg1: i32) -> (i32, i32) {
    %c0_i32 = arith.constant 0 : i32
    %c0_i32_0 = arith.constant 0 : i32
    return %arg0, %c0_i32 : i32, i32
  }
}

</mosaic_0001>

<llo_original>
// kernel: tpu_custom_call.1
$region0: #{tpu_custom_call.1}
  #allocation0 [shape = 'u32[]', space=smem, size = 0x4, offset = 0x4, fixed_abs, tag = 'smem constant byte address 0x4 - core index']
  #allocation1 [shape = 'u32[72,128]{1,0:T(1,128)}', space=vmem, size = 0x9000, scoped, tag = 'internal scratch']
  %s0 = inlined_call_operand.hbm [shape: f32[256,256], index: 0, kind: input, shape index: {}]
  %s1 = inlined_call_operand.hbm [shape: bf16[256,128], index: 1, kind: input, shape index: {}]
  %s2 = inlined_call_operand.hbm [shape: f32[256,128], index: 2, kind: input, shape index: {}]
  %s3 = inlined_call_operand.hbm [shape: f32[256,128], index: 3, kind: output, shape index: {}]
  %s4 = sld [smem:[#allocation0]]
  $region65: #{tpu_custom_call.1} parent=0
    _
  %s6 = ssub.s32 1, %s4
  %s7 = scalar_select 0, %s6, %s4
  $region1: #{tpu_custom_call.1} parent=0
    #allocation2 [shape = 'u8[131072]{0}', space=vmem, size = 0x20000, scoped, tag = 'input window, operand 0']
    #allocation3 [shape = 's32[2]{0}', space=sflag, size = 0x8, scoped, tag = 'scoped memory for tpu_custom_call.1']
    #allocation4 [shape = 's32[2]{0}', space=sflag, size = 0x8, scoped, tag = 'scoped memory for tpu_custom_call.1']
    #allocation5 [shape = 'u8[65536]{0}', space=vmem, size = 0x10000, scoped, tag = 'input window, operand 1, single buffered']
    #allocation6 [shape = 's32[1]{0}', space=sflag, size = 0x4, scoped, tag = 'scoped memory for tpu_custom_call.1']
    #allocation7 [shape = 'u8[131072]{0}', space=vmem, size = 0x20000, scoped, tag = 'input window, operand 2']
    #allocation8 [shape = 'u8[131072]{0}', space=vmem, size = 0x20000, scoped, tag = 'output window, operand 0']
    %8 = vsyncpa [#allocation3], 0
    %s9 = scalar_lea.sflag [#allocation3], 1
    %10 = vsyncpa %s9, 0
    %11 = vsyncpa [#allocation6], 0
    %12 = vsyncpa [#allocation4], 0
    %s13 = scalar_lea.sflag [#allocation4], 1
    %14 = vsyncpa %s13, 0
    loop: start=0, step=1, limit=6
    $region2: #{tpu_custom_call.1} parent=1 // loop_pre_header
      _
    $region3: #{tpu_custom_call.1} parent=1 // loop_header
      %s16 = sphi 0, %s20
      %p17 = scmp.ge.s32.totalorder %s16, 6
      %s23 = sphi 0, %s35
      %s24 = sphi 0, %s31
      %s25 = sphi 0, %s23
      %s26 = sphi 0, %s24
      %s27 = sphi 0, %s25
      %s28 = sphi 0, %s26
      %s40 = sphi 0, %s42
      %s43 = sphi 0, %s40
      %s44 = sphi 0, %s43
      %s60 = sphi 0, %s44
      %s64 = sphi 0, %s64
      %s66 = sphi 0, %s64
      %s67 = sphi 0, %s66
      %s81 = sphi 0, %s67
      %s87 = sphi 0, %s89
      %s90 = sphi 0, %s87
      %s91 = sphi 0, %s90
      %s107 = sphi 0, %s91
      %s113 = sphi 0, %s115
      %s116 = sphi 0, %s113
      %s117 = sphi 0, %s116
      %s133 = sphi 0, %s117
    $region4: #{tpu_custom_call.1} parent=1 // loop_header_branch
      %19 = sbr.rel (%p17) target = $region8
    $region5: #{tpu_custom_call.1} parent=1 // loop_body
      %s21 = ssub.s32 %s16, 1
      %s22 = ssub.s32 %s16, 2
      %s29 = sadd.s32 1, %s24
      %p30 = scmp.ge.s32.totalorder %s29, 2
      %s31 = scalar_select %p30, 0, %s29
      %s32 = sadd.s32 1, %s23
      %s33 = scalar_select %p30, %s32, %s23
      %p34 = scmp.ge.s32.totalorder %s33, 2
      %s35 = scalar_select %p34, 0, %s33
      %s36 = ssub.s32 %s23, %s35
      %s37 = ssub.s32 %s24, %s31
      %s38 = sor.u32 %s36, %s37
      %p39 = scmp.eq.s32.totalorder %s38, 0
      %s41 = sadd.s32 %s40, 1
      %s42 = scalar_select %p39, %s40, %s41
      %p45 = pneg %p39
      %p46 = scmp.eq.s32.totalorder %s16, 3
      %p47 = por %p45, %p46
      %p48 = scmp.ne.s32.totalorder %s40, %s43
      %p49 = scmp.eq.s32.totalorder %s16, 0
      %p50 = por %p48, %p49
      %p51 = scmp.ne.s32.totalorder %s40, %s43
      %p52 = scmp.eq.s32.totalorder %s21, 3
      %p53 = por %p51, %p52
      %p54 = scmp.ne.s32.totalorder %s43, %s44
      %p55 = scmp.eq.s32.totalorder %s21, 0
      %p56 = por %p54, %p55
      %p57 = scmp.ne.s32.totalorder %s43, %s44
      %p58 = scmp.eq.s32.totalorder %s22, 3
      %p59 = por %p57, %p58
      %p61 = scmp.ne.s32.totalorder %s44, %s60
      %p62 = scmp.eq.s32.totalorder %s22, 0
      %p63 = por %p61, %p62
      %s65 = sadd.s32 %s64, 1
      %p68 = scmp.eq.s32.totalorder %s16, 3
      %p69 = scmp.ne.s32.totalorder %s64, %s66
      %p70 = scmp.eq.s32.totalorder %s16, 0
      %p71 = por %p69, %p70
      %p72 = scmp.ne.s32.totalorder %s64, %s66
      %p73 = scmp.eq.s32.totalorder %s21, 3
      %p74 = por %p72, %p73
      %p75 = scmp.ne.s32.totalorder %s66, %s67
      %p76 = scmp.eq.s32.totalorder %s21, 0
      %p77 = por %p75, %p76
      %p78 = scmp.ne.s32.totalorder %s66, %s67
      %p79 = scmp.eq.s32.totalorder %s22, 3
      %p80 = por %p78, %p79
      %p82 = scmp.ne.s32.totalorder %s67, %s81
      %p83 = scmp.eq.s32.totalorder %s22, 0
      %p84 = por %p82, %p83
      %s85 = ssub.s32 %s23, %s35
      %p86 = scmp.eq.s32.totalorder %s85, 0
      %s88 = sadd.s32 %s87, 1
      %s89 = scalar_select %p86, %s87, %s88
      %p92 = pneg %p86
      %p93 = scmp.eq.s32.totalorder %s16, 3
      %p94 = por %p92, %p93
      %p95 = scmp.ne.s32.totalorder %s87, %s90
      %p96 = scmp.eq.s32.totalorder %s16, 0
      %p97 = por %p95, %p96
      %p98 = scmp.ne.s32.totalorder %s87, %s90
      %p99 = scmp.eq.s32.totalorder %s21, 3
      %p100 = por %p98, %p99
      %p101 = scmp.ne.s32.totalorder %s90, %s91
      %p102 = scmp.eq.s32.totalorder %s21, 0
      %p103 = por %p101, %p102
      %p104 = scmp.ne.s32.totalorder %s90, %s91
      %p105 = scmp.eq.s32.totalorder %s22, 3
      %p106 = por %p104, %p105
      %p108 = scmp.ne.s32.totalorder %s91, %s107
      %p109 = scmp.eq.s32.totalorder %s22, 0
      %p110 = por %p108, %p109
      %s111 = ssub.s32 %s23, %s35
      %p112 = scmp.eq.s32.totalorder %s111, 0
      %s114 = sadd.s32 %s113, 1
      %s115 = scalar_select %p112, %s113, %s114
      %p118 = pneg %p112
      %p119 = scmp.eq.s32.totalorder %s16, 3
      %p120 = por %p118, %p119
      %p121 = scmp.ne.s32.totalorder %s113, %s116
      %p122 = scmp.eq.s32.totalorder %s16, 0
      %p123 = por %p121, %p122
      %p124 = scmp.ne.s32.totalorder %s113, %s116
      %p125 = scmp.eq.s32.totalorder %s21, 3
      %p126 = por %p124, %p125
      %p127 = scmp.ne.s32.totalorder %s116, %s117
      %p128 = scmp.eq.s32.totalorder %s21, 0
      %p129 = por %p127, %p128
      %p130 = scmp.ne.s32.totalorder %s116, %s117
      %p131 = scmp.eq.s32.totalorder %s22, 3
      %p132 = por %p130, %p131
      %p134 = scmp.ne.s32.totalorder %s117, %s133
      %p135 = scmp.eq.s32.totalorder %s22, 0
      %p136 = por %p134, %p135
      %p137 = scmp.le.s32.totalorder 1, %s16
      %p138 = scmp.lt.s32.totalorder %s16, 5
      %p139 = pnand %p137, %p138
      %p140 = pneg %p139
      // Predicated region
      $region9: #{tpu_custom_call.1} parent=5 // pred_check
        _
      $region10: #{tpu_custom_call.1} parent=5 // pred_check_branch
        %142 = sbr.rel (%p139) target = $region12
      $region11: #{tpu_custom_call.1} parent=5 // pred_region
        %s143 = ssub.s32 %s16, 1
        // Predicated region
        $region13: #{tpu_custom_call.1} parent=11 // pred_check
          %p144 = pneg %p77
        $region14: #{tpu_custom_call.1} parent=11 // pred_check_branch
          %146 = sbr.rel (%p144) target = $region16
        $region15: #{tpu_custom_call.1} parent=11 // pred_region
          %148 = vsyncadd [#allocation6], 0
          %s149 = sshll.u32 %s1, 4
          %s150 = int_to_ptr.hbm [resolvable:$true] %s149
          %s151 = sshll.u32 [#allocation5], 4
          %s152 = int_to_ptr.vmem [resolvable:$true] %s151
          %157 = dma.hbm_to_vmem [thread:$0]  %s150, 2048, %s152, [#allocation6], 64, 64, 4
        $region16: #{tpu_custom_call.1} parent=11 // pred_fallthru
          _
      $region12: #{tpu_custom_call.1} parent=5 // pred_fallthru
        _
      %p158 = scmp.lt.s32.totalorder %s16, 4
      // Predicated region
      $region17: #{tpu_custom_call.1} parent=5 // pred_check
        %p159 = pneg %p158
      $region18: #{tpu_custom_call.1} parent=5 // pred_check_branch
        %161 = sbr.rel (%p159) target = $region20
      $region19: #{tpu_custom_call.1} parent=5 // pred_region
        // Predicated region
        $region21: #{tpu_custom_call.1} parent=19 // pred_check
          %p162 = pneg %p50
        $region22: #{tpu_custom_call.1} parent=19 // pred_check_branch
          %164 = sbr.rel (%p162) target = $region24
        $region23: #{tpu_custom_call.1} parent=19 // pred_region
          %s165 = sand.u32 %s16, 1
          %s166 = scalar_lea.sflag [#allocation3], %s165
          %s167 = sand.u32 %s40, 1
          %s168 = smul.addr %s167, 128
          %s169 = scalar_lea.vmem [#allocation2], %s168
          %s170 = smul.u32 16, %s23
          %172 = vsyncadd %s166, 0
          %s173 = smul.addr %s170, 2
          %s174 = sadd.s32 %s24, %s173
          %s175 = smul.addr %s174, 8
          %s176 = scalar_lea.hbm %s0, %s175
          %s177 = sshll.u32 %s176, 4
          %s178 = int_to_ptr.hbm [resolvable:$true] %s177
          %s179 = sshll.u32 %s169, 4
          %s180 = int_to_ptr.vmem [resolvable:$true] %s179
          %185 = dma.hbm_to_vmem [thread:$0]  %s178, 2048, %s180, %s166, 256, 128, 8
        $region24: #{tpu_custom_call.1} parent=19 // pred_fallthru
          _
        // Predicated region
        $region25: #{tpu_custom_call.1} parent=19 // pred_check
          %p186 = pneg %p97
        $region26: #{tpu_custom_call.1} parent=19 // pred_check_branch
          %188 = sbr.rel (%p186) target = $region28
        $region27: #{tpu_custom_call.1} parent=19 // pred_region
          %s189 = sand.u32 %s16, 1
          %s190 = scalar_lea.sflag [#allocation3], %s189
          %s191 = sand.u32 %s87, 1
          %s192 = smul.addr %s191, 128
          %s193 = scalar_lea.vmem [#allocation7], %s192
          %s194 = smul.u32 16, %s23
          %196 = vsyncadd %s190, 0
          %s197 = smul.addr %s194, 8
          %s198 = scalar_lea.hbm %s2, %s197
          %s199 = sshll.u32 %s198, 4
          %s200 = int_to_ptr.hbm [resolvable:$true] %s199
          %s201 = sshll.u32 %s193, 4
          %s202 = int_to_ptr.vmem [resolvable:$true] %s201
          %207 = dma.hbm_to_vmem [thread:$0]  %s200, 2048, %s202, %s190, 128, 128, 8
        $region28: #{tpu_custom_call.1} parent=19 // pred_fallthru
          _
      $region20: #{tpu_custom_call.1} parent=5 // pred_fallthru
        _
      %p208 = scmp.le.s32.totalorder 1, %s16
      %p209 = scmp.lt.s32.totalorder %s16, 5
      %p210 = pnand %p208, %p209
      %p211 = pneg %p210
      // Predicated region
      $region29: #{tpu_custom_call.1} parent=5 // pred_check
        _
      $region30: #{tpu_custom_call.1} parent=5 // pred_check_branch
        %213 = sbr.rel (%p210) target = $region32
      $region31: #{tpu_custom_call.1} parent=5 // pred_region
        %s214 = ssub.s32 %s16, 1
        %s215 = sand.u32 %s21, 1
        %s216 = scalar_lea.sflag [#allocation3], %s215
        %s217 = sand.u32 %s43, 1
        %s218 = smul.addr %s217, 128
        %s219 = scalar_lea.vmem [#allocation2], %s218
        // Predicated region
        $region33: #{tpu_custom_call.1} parent=31 // pred_check
          %p220 = pneg %p56
        $region34: #{tpu_custom_call.1} parent=31 // pred_check_branch
          %222 = sbr.rel (%p220) target = $region36
        $region35: #{tpu_custom_call.1} parent=31 // pred_region
          %224 = dma.done %s216, 2048
        $region36: #{tpu_custom_call.1} parent=31 // pred_fallthru
          _
        // Predicated region
        $region37: #{tpu_custom_call.1} parent=31 // pred_check
          %p225 = pneg %p77
        $region38: #{tpu_custom_call.1} parent=31 // pred_check_branch
          %227 = sbr.rel (%p225) target = $region40
        $region39: #{tpu_custom_call.1} parent=31 // pred_region
          %229 = dma.done [#allocation6], 2048
        $region40: #{tpu_custom_call.1} parent=31 // pred_fallthru
          _
        %s230 = sand.u32 %s21, 1
        %s231 = scalar_lea.sflag [#allocation3], %s230
        %s232 = sand.u32 %s90, 1
        %s233 = smul.addr %s232, 128
        %s234 = scalar_lea.vmem [#allocation7], %s233
        // Predicated region
        $region41: #{tpu_custom_call.1} parent=31 // pred_check
          %p235 = pneg %p103
        $region42: #{tpu_custom_call.1} parent=31 // pred_check_branch
          %237 = sbr.rel (%p235) target = $region44
        $region43: #{tpu_custom_call.1} parent=31 // pred_region
          %239 = dma.done %s231, 2048
        $region44: #{tpu_custom_call.1} parent=31 // pred_fallthru
          _
        %s240 = sand.u32 %s21, 1
        %s241 = scalar_lea.sflag [#allocation3], %s240
        %s242 = sand.u32 %s43, 1
        %s243 = smul.addr %s242, 128
        %s244 = scalar_lea.vmem [#allocation2], %s243
        %p245 = pneg %p56
        %p246 = pneg %p53
        %p247 = pneg %p77
        %p248 = pneg %p74
        %s249 = sand.u32 %s21, 1
        %s250 = scalar_lea.sflag [#allocation3], %s249
        %s251 = sand.u32 %s90, 1
        %s252 = smul.addr %s251, 128
        %s253 = scalar_lea.vmem [#allocation7], %s252
        %p254 = pneg %p103
        %p255 = pneg %p100
        %p256 = pneg %p129
        %p257 = pneg %p126
        %s258 = sand.u32 %s116, 1
        %s259 = scalar_lea.sflag [#allocation4], %s258
        %s260 = sand.u32 %s116, 1
        %s261 = smul.addr %s260, 128
        %s262 = scalar_lea.vmem [#allocation8], %s261
        %s263 = smul.u32 16, %s25
        %s264 = smul.u32 16, %s25
        %s265 = smul.u32 16, %s25
        %p266 = scmp.eq.s32.totalorder %s26, 0
        // Predicated region
        $region45: #{tpu_custom_call.1} parent=31 // pred_check
          %p267 = pneg %p266
        $region46: #{tpu_custom_call.1} parent=31 // pred_check_branch
          %269 = sbr.rel (%p267) target = $region48
        $region47: #{tpu_custom_call.1} parent=31 // pred_region
          %270 = vst [vmem:[%s262] sm:$0xff] 0.0
          %271 = vst [vmem:[%s262 + $0x8] sm:$0xff] 0.0
          %272 = vst [vmem:[%s262 + $0x10] sm:$0xff] 0.0
          %273 = vst [vmem:[%s262 + $0x18] sm:$0xff] 0.0
          %274 = vst [vmem:[%s262 + $0x20] sm:$0xff] 0.0
          %275 = vst [vmem:[%s262 + $0x28] sm:$0xff] 0.0
          %276 = vst [vmem:[%s262 + $0x30] sm:$0xff] 0.0
          %277 = vst [vmem:[%s262 + $0x38] sm:$0xff] 0.0
          %278 = vst [vmem:[%s262 + $0x40] sm:$0xff] 0.0
          %279 = vst [vmem:[%s262 + $0x48] sm:$0xff] 0.0
          %280 = vst [vmem:[%s262 + $0x50] sm:$0xff] 0.0
          %281 = vst [vmem:[%s262 + $0x58] sm:$0xff] 0.0
          %282 = vst [vmem:[%s262 + $0x60] sm:$0xff] 0.0
          %283 = vst [vmem:[%s262 + $0x68] sm:$0xff] 0.0
          %284 = vst [vmem:[%s262 + $0x70] sm:$0xff] 0.0
          %285 = vst [vmem:[%s262 + $0x78] sm:$0xff] 0.0
        $region48: #{tpu_custom_call.1} parent=31 // pred_fallthru
          _
        %v286 = vld [vmem:[%s219] sm:$0xff]
        %v287 = vld [vmem:[%s219 + $0x8] sm:$0xff]
        %v288 = vld [vmem:[%s219 + $0x10] sm:$0xff]
        %v289 = vld [vmem:[%s219 + $0x18] sm:$0xff]
        %v290 = vld [vmem:[%s219 + $0x20] sm:$0xff]
        %v291 = vld [vmem:[%s219 + $0x28] sm:$0xff]
        %v292 = vld [vmem:[%s219 + $0x30] sm:$0xff]
        %v293 = vld [vmem:[%s219 + $0x38] sm:$0xff]
        %v294 = vld [vmem:[%s219 + $0x40] sm:$0xff]
        %v295 = vld [vmem:[%s219 + $0x48] sm:$0xff]
        %v296 = vld [vmem:[%s219 + $0x50] sm:$0xff]
        %v297 = vld [vmem:[%s219 + $0x58] sm:$0xff]
        %v298 = vld [vmem:[%s219 + $0x60] sm:$0xff]
        %v299 = vld [vmem:[%s219 + $0x68] sm:$0xff]
        %v300 = vld [vmem:[%s219 + $0x70] sm:$0xff]
        %v301 = vld [vmem:[%s219 + $0x78] sm:$0xff]
        %v302 = vpack.c.bf16 %v287, %v286
        %v303 = vpack.c.bf16 %v289, %v288
        %v304 = vpack.c.bf16 %v291, %v290
        %v305 = vpack.c.bf16 %v293, %v292
        %v306 = vpack.c.bf16 %v295, %v294
        %v307 = vpack.c.bf16 %v297, %v296
        %v308 = vpack.c.bf16 %v299, %v298
        %v309 = vpack.c.bf16 %v301, %v300
        %s310 = smul.u32 %s26, 128
        %s311 = sshra.s32 %s310, 3
        %s312 = sand.u32 %s310, 7
        %s313 = smul.addr %s311, 4
        %s314 = scalar_lea.vmem [#allocation5], %s313
        %v315 = vld [vmem:[%s314] sm:$0xf]
        %v316 = vld [vmem:[%s314 + $0x4] sm:$0xf]
        %v317 = vld [vmem:[%s314 + $0x8] sm:$0xf]
        %v318 = vld [vmem:[%s314 + $0xc] sm:$0xf]
        %v319 = vld [vmem:[%s314 + $0x10] sm:$0xf]
        %v320 = vld [vmem:[%s314 + $0x14] sm:$0xf]
        %v321 = vld [vmem:[%s314 + $0x18] sm:$0xf]
        %v322 = vld [vmem:[%s314 + $0x1c] sm:$0xf]
        %v323 = vld [vmem:[%s314 + $0x20] sm:$0xf]
        %v324 = vld [vmem:[%s314 + $0x24] sm:$0xf]
        %v325 = vld [vmem:[%s314 + $0x28] sm:$0xf]
        %v326 = vld [vmem:[%s314 + $0x2c] sm:$0xf]
        %v327 = vld [vmem:[%s314 + $0x30] sm:$0xf]
        %v328 = vld [vmem:[%s314 + $0x34] sm:$0xf]
        %v329 = vld [vmem:[%s314 + $0x38] sm:$0xf]
        %v330 = vld [vmem:[%s314 + $0x3c] sm:$0xf]
        %v331 = vld [vmem:[%s262] sm:$0xff]
        %v332 = vld [vmem:[%s262 + $0x8] sm:$0xff]
        %v333 = vld [vmem:[%s262 + $0x10] sm:$0xff]
        %v334 = vld [vmem:[%s262 + $0x18] sm:$0xff]
        %v335 = vld [vmem:[%s262 + $0x20] sm:$0xff]
        %v336 = vld [vmem:[%s262 + $0x28] sm:$0xff]
        %v337 = vld [vmem:[%s262 + $0x30] sm:$0xff]
        %v338 = vld [vmem:[%s262 + $0x38] sm:$0xff]
        %v339 = vld [vmem:[%s262 + $0x40] sm:$0xff]
        %v340 = vld [vmem:[%s262 + $0x48] sm:$0xff]
        %v341 = vld [vmem:[%s262 + $0x50] sm:$0xff]
        %v342 = vld [vmem:[%s262 + $0x58] sm:$0xff]
        %v343 = vld [vmem:[%s262 + $0x60] sm:$0xff]
        %v344 = vld [vmem:[%s262 + $0x68] sm:$0xff]
        %v345 = vld [vmem:[%s262 + $0x70] sm:$0xff]
        %v346 = vld [vmem:[%s262 + $0x78] sm:$0xff]
        %v363 = vunpack.c.l.b16 %v315
        %v364 = vunpack.c.l.b16 %v316
        %v365 = vunpack.c.l.b16 %v317
        %v366 = vunpack.c.l.b16 %v318
        %v367 = vunpack.c.l.b16 %v319
        %v368 = vunpack.c.l.b16 %v320
        %v369 = vunpack.c.l.b16 %v321
        %v370 = vunpack.c.l.b16 %v322
        %v371 = vunpack.c.l.b16 %v323
        %v372 = vunpack.c.l.b16 %v324
        %v373 = vunpack.c.l.b16 %v325
        %v374 = vunpack.c.l.b16 %v326
        %v375 = vunpack.c.l.b16 %v327
        %v376 = vunpack.c.l.b16 %v328
        %v377 = vunpack.c.l.b16 %v329
        %v378 = vunpack.c.l.b16 %v330
        %v379 = vpack.c.b16 %v364, %v363
        %v380 = vpack.c.b16 %v366, %v365
        %v381 = vpack.c.b16 %v368, %v367
        %v382 = vpack.c.b16 %v370, %v369
        %v383 = vpack.c.b16 %v372, %v371
        %v384 = vpack.c.b16 %v374, %v373
        %v385 = vpack.c.b16 %v376, %v375
        %v386 = vpack.c.b16 %v378, %v377
        %395 = vmatpush.bf16.msra.mxu0 %v386
        %396 = vmatpush.bf16.msra.mxu0 %v385
        %397 = vmatpush.bf16.msra.mxu0 %v384
        %398 = vmatpush.bf16.msra.mxu0 %v383
        %399 = vmatpush.bf16.msra.mxu0 %v382
        %400 = vmatpush.bf16.msra.mxu0 %v381
        %401 = vmatpush.bf16.msra.mxu0 %v380
        %402 = vmatpush.bf16.msra.mxu0 %v379
        %403 = vmatmul.bf16.gmra.mxu0 %v302
        %v404 = vpop.f32.mrf.mxu0
        %v405 = vadd.f32 0.0, %v404
        %v406 = vpop.f32.mrf.mxu0
        %v407 = vadd.f32 0.0, %v406
        %408 = vmatmul.bf16.gmra.mxu0 %v303
        %v409 = vpop.f32.mrf.mxu0
        %v410 = vadd.f32 0.0, %v409
        %v411 = vpop.f32.mrf.mxu0
        %v412 = vadd.f32 0.0, %v411
        %413 = vmatmul.bf16.gmra.mxu0 %v304
        %v414 = vpop.f32.mrf.mxu0
        %v415 = vadd.f32 0.0, %v414
        %v416 = vpop.f32.mrf.mxu0
        %v417 = vadd.f32 0.0, %v416
        %418 = vmatmul.bf16.gmra.mxu0 %v305
        %v419 = vpop.f32.mrf.mxu0
        %v420 = vadd.f32 0.0, %v419
        %v421 = vpop.f32.mrf.mxu0
        %v422 = vadd.f32 0.0, %v421
        %423 = vmatmul.bf16.gmra.mxu0 %v306
        %v424 = vpop.f32.mrf.mxu0
        %v425 = vadd.f32 0.0, %v424
        %v426 = vpop.f32.mrf.mxu0
        %v427 = vadd.f32 0.0, %v426
        %428 = vmatmul.bf16.gmra.mxu0 %v307
        %v429 = vpop.f32.mrf.mxu0
        %v430 = vadd.f32 0.0, %v429
        %v431 = vpop.f32.mrf.mxu0
        %v432 = vadd.f32 0.0, %v431
        %433 = vmatmul.bf16.gmra.mxu0 %v308
        %v434 = vpop.f32.mrf.mxu0
        %v435 = vadd.f32 0.0, %v434
        %v436 = vpop.f32.mrf.mxu0
        %v437 = vadd.f32 0.0, %v436
        %438 = vmatmul.bf16.gmra.mxu0 %v309
        %v439 = vpop.f32.mrf.mxu0
        %v440 = vadd.f32 0.0, %v439
        %v441 = vpop.f32.mrf.mxu0
        %v442 = vadd.f32 0.0, %v441
        %443 = vdwg.mxu0
        %v444 = vadd.f32 %v331, %v405
        %v445 = vadd.f32 %v332, %v407
        %v446 = vadd.f32 %v333, %v410
        %v447 = vadd.f32 %v334, %v412
        %v448 = vadd.f32 %v335, %v415
        %v449 = vadd.f32 %v336, %v417
        %v450 = vadd.f32 %v337, %v420
        %v451 = vadd.f32 %v338, %v422
        %v452 = vadd.f32 %v339, %v425
        %v453 = vadd.f32 %v340, %v427
        %v454 = vadd.f32 %v341, %v430
        %v455 = vadd.f32 %v342, %v432
        %v456 = vadd.f32 %v343, %v435
        %v457 = vadd.f32 %v344, %v437
        %v458 = vadd.f32 %v345, %v440
        %v459 = vadd.f32 %v346, %v442
        %460 = vst [vmem:[%s262] sm:$0xff] %v444
        %461 = vst [vmem:[%s262 + $0x8] sm:$0xff] %v445
        %462 = vst [vmem:[%s262 + $0x10] sm:$0xff] %v446
        %463 = vst [vmem:[%s262 + $0x18] sm:$0xff] %v447
        %464 = vst [vmem:[%s262 + $0x20] sm:$0xff] %v448
        %465 = vst [vmem:[%s262 + $0x28] sm:$0xff] %v449
        %466 = vst [vmem:[%s262 + $0x30] sm:$0xff] %v450
        %467 = vst [vmem:[%s262 + $0x38] sm:$0xff] %v451
        %468 = vst [vmem:[%s262 + $0x40] sm:$0xff] %v452
        %469 = vst [vmem:[%s262 + $0x48] sm:$0xff] %v453
        %470 = vst [vmem:[%s262 + $0x50] sm:$0xff] %v454
        %471 = vst [vmem:[%s262 + $0x58] sm:$0xff] %v455
        %472 = vst [vmem:[%s262 + $0x60] sm:$0xff] %v456
        %473 = vst [vmem:[%s262 + $0x68] sm:$0xff] %v457
        %474 = vst [vmem:[%s262 + $0x70] sm:$0xff] %v458
        %475 = vst [vmem:[%s262 + $0x78] sm:$0xff] %v459
        %p476 = scmp.eq.s32.totalorder %s26, 1
        // Predicated region
        $region49: #{tpu_custom_call.1} parent=31 // pred_check
          %p477 = pneg %p476
        $region50: #{tpu_custom_call.1} parent=31 // pred_check_branch
          %479 = sbr.rel (%p477) target = $region52
        $region51: #{tpu_custom_call.1} parent=31 // pred_region
          %v480 = vld [vmem:[%s262] sm:$0xff]
          %v481 = vld [vmem:[%s262 + $0x8] sm:$0xff]
          %v482 = vld [vmem:[%s262 + $0x10] sm:$0xff]
          %v483 = vld [vmem:[%s262 + $0x18] sm:$0xff]
          %v484 = vld [vmem:[%s262 + $0x20] sm:$0xff]
          %v485 = vld [vmem:[%s262 + $0x28] sm:$0xff]
          %v486 = vld [vmem:[%s262 + $0x30] sm:$0xff]
          %v487 = vld [vmem:[%s262 + $0x38] sm:$0xff]
          %v488 = vld [vmem:[%s262 + $0x40] sm:$0xff]
          %v489 = vld [vmem:[%s262 + $0x48] sm:$0xff]
          %v490 = vld [vmem:[%s262 + $0x50] sm:$0xff]
          %v491 = vld [vmem:[%s262 + $0x58] sm:$0xff]
          %v492 = vld [vmem:[%s262 + $0x60] sm:$0xff]
          %v493 = vld [vmem:[%s262 + $0x68] sm:$0xff]
          %v494 = vld [vmem:[%s262 + $0x70] sm:$0xff]
          %v495 = vld [vmem:[%s262 + $0x78] sm:$0xff]
          %v496 = vlaneseq
          %v497 = vand.u32 %v496, 127
          %vm498 = vcmp.eq.s32.totalorder %v497, 16
          %v499 = vsel %vm498, %v480, 0.0
          %v500 = vsel %vm498, %v481, 0.0
          %v501 = vsel %vm498, %v482, 0.0
          %v502 = vsel %vm498, %v483, 0.0
          %v503 = vsel %vm498, %v484, 0.0
          %v504 = vsel %vm498, %v485, 0.0
          %v505 = vsel %vm498, %v486, 0.0
          %v506 = vsel %vm498, %v487, 0.0
          %v507 = vsel %vm498, %v488, 0.0
          %v508 = vsel %vm498, %v489, 0.0
          %v509 = vsel %vm498, %v490, 0.0
          %v510 = vsel %vm498, %v491, 0.0
          %v511 = vsel %vm498, %v492, 0.0
          %v512 = vsel %vm498, %v493, 0.0
          %v513 = vsel %vm498, %v494, 0.0
          %v514 = vsel %vm498, %v495, 0.0
          %515 = vadd.xlane.f32.xlu0 %v499
          %v516 = vpop.xlane.xlu0 %515
          %517 = vadd.xlane.f32.xlu0 %v500
          %v518 = vpop.xlane.xlu0 %517
          %519 = vadd.xlane.f32.xlu0 %v501
          %v520 = vpop.xlane.xlu0 %519
          %521 = vadd.xlane.f32.xlu0 %v502
          %v522 = vpop.xlane.xlu0 %521
          %523 = vadd.xlane.f32.xlu0 %v503
          %v524 = vpop.xlane.xlu0 %523
          %525 = vadd.xlane.f32.xlu0 %v504
          %v526 = vpop.xlane.xlu0 %525
          %527 = vadd.xlane.f32.xlu0 %v505
          %v528 = vpop.xlane.xlu0 %527
          %529 = vadd.xlane.f32.xlu0 %v506
          %v530 = vpop.xlane.xlu0 %529
          %531 = vadd.xlane.f32.xlu0 %v507
          %v532 = vpop.xlane.xlu0 %531
          %533 = vadd.xlane.f32.xlu0 %v508
          %v534 = vpop.xlane.xlu0 %533
          %535 = vadd.xlane.f32.xlu0 %v509
          %v536 = vpop.xlane.xlu0 %535
          %537 = vadd.xlane.f32.xlu0 %v510
          %v538 = vpop.xlane.xlu0 %537
          %539 = vadd.xlane.f32.xlu0 %v511
          %v540 = vpop.xlane.xlu0 %539
          %541 = vadd.xlane.f32.xlu0 %v512
          %v542 = vpop.xlane.xlu0 %541
          %543 = vadd.xlane.f32.xlu0 %v513
          %v544 = vpop.xlane.xlu0 %543
          %545 = vadd.xlane.f32.xlu0 %v514
          %v546 = vpop.xlane.xlu0 %545
          %v547 = vmax.f32 %v516, 1.0
          %v548 = vmax.f32 %v518, 1.0
          %v549 = vmax.f32 %v520, 1.0
          %v550 = vmax.f32 %v522, 1.0
          %v551 = vmax.f32 %v524, 1.0
          %v552 = vmax.f32 %v526, 1.0
          %v553 = vmax.f32 %v528, 1.0
          %v554 = vmax.f32 %v530, 1.0
          %v555 = vmax.f32 %v532, 1.0
          %v556 = vmax.f32 %v534, 1.0
          %v557 = vmax.f32 %v536, 1.0
          %v558 = vmax.f32 %v538, 1.0
          %v559 = vmax.f32 %v540, 1.0
          %v560 = vmax.f32 %v542, 1.0
          %v561 = vmax.f32 %v544, 1.0
          %v562 = vmax.f32 %v546, 1.0
          %v563 = vrcp.pop %v547
          %v564 = vrcp.pop %v548
          %v565 = vrcp.pop %v549
          %v566 = vrcp.pop %v550
          %v567 = vrcp.pop %v551
          %v568 = vrcp.pop %v552
          %v569 = vrcp.pop %v553
          %v570 = vrcp.pop %v554
          %v571 = vrcp.pop %v555
          %v572 = vrcp.pop %v556
          %v573 = vrcp.pop %v557
          %v574 = vrcp.pop %v558
          %v575 = vrcp.pop %v559
          %v576 = vrcp.pop %v560
          %v577 = vrcp.pop %v561
          %v578 = vrcp.pop %v562
          %v579 = vmul.f32 %v480, %v563
          %v580 = vmul.f32 %v481, %v564
          %v581 = vmul.f32 %v482, %v565
          %v582 = vmul.f32 %v483, %v566
          %v583 = vmul.f32 %v484, %v567
          %v584 = vmul.f32 %v485, %v568
          %v585 = vmul.f32 %v486, %v569
          %v586 = vmul.f32 %v487, %v570
          %v587 = vmul.f32 %v488, %v571
          %v588 = vmul.f32 %v489, %v572
          %v589 = vmul.f32 %v490, %v573
          %v590 = vmul.f32 %v491, %v574
          %v591 = vmul.f32 %v492, %v575
          %v592 = vmul.f32 %v493, %v576
          %v593 = vmul.f32 %v494, %v577
          %v594 = vmul.f32 %v495, %v578
          %v595 = vld [vmem:[%s234] sm:$0xff]
          %v596 = vld [vmem:[%s234 + $0x8] sm:$0xff]
          %v597 = vld [vmem:[%s234 + $0x10] sm:$0xff]
          %v598 = vld [vmem:[%s234 + $0x18] sm:$0xff]
          %v599 = vld [vmem:[%s234 + $0x20] sm:$0xff]
          %v600 = vld [vmem:[%s234 + $0x28] sm:$0xff]
          %v601 = vld [vmem:[%s234 + $0x30] sm:$0xff]
          %v602 = vld [vmem:[%s234 + $0x38] sm:$0xff]
          %v603 = vld [vmem:[%s234 + $0x40] sm:$0xff]
          %v604 = vld [vmem:[%s234 + $0x48] sm:$0xff]
          %v605 = vld [vmem:[%s234 + $0x50] sm:$0xff]
          %v606 = vld [vmem:[%s234 + $0x58] sm:$0xff]
          %v607 = vld [vmem:[%s234 + $0x60] sm:$0xff]
          %v608 = vld [vmem:[%s234 + $0x68] sm:$0xff]
          %v609 = vld [vmem:[%s234 + $0x70] sm:$0xff]
          %v610 = vld [vmem:[%s234 + $0x78] sm:$0xff]
          %v611 = vadd.f32 %v579, %v595
          %v612 = vadd.f32 %v580, %v596
          %v613 = vadd.f32 %v581, %v597
          %v614 = vadd.f32 %v582, %v598
          %v615 = vadd.f32 %v583, %v599
          %v616 = vadd.f32 %v584, %v600
          %v617 = vadd.f32 %v585, %v601
          %v618 = vadd.f32 %v586, %v602
          %v619 = vadd.f32 %v587, %v603
          %v620 = vadd.f32 %v588, %v604
          %v621 = vadd.f32 %v589, %v605
          %v622 = vadd.f32 %v590, %v606
          %v623 = vadd.f32 %v591, %v607
          %v624 = vadd.f32 %v592, %v608
          %v625 = vadd.f32 %v593, %v609
          %v626 = vadd.f32 %v594, %v610
          %v627 = vmax.f32 %v611, 0.0
          %v628 = vmax.f32 %v612, 0.0
          %v629 = vmax.f32 %v613, 0.0
          %v630 = vmax.f32 %v614, 0.0
          %v631 = vmax.f32 %v615, 0.0
          %v632 = vmax.f32 %v616, 0.0
          %v633 = vmax.f32 %v617, 0.0
          %v634 = vmax.f32 %v618, 0.0
          %v635 = vmax.f32 %v619, 0.0
          %v636 = vmax.f32 %v620, 0.0
          %v637 = vmax.f32 %v621, 0.0
          %v638 = vmax.f32 %v622, 0.0
          %v639 = vmax.f32 %v623, 0.0
          %v640 = vmax.f32 %v624, 0.0
          %v641 = vmax.f32 %v625, 0.0
          %v642 = vmax.f32 %v626, 0.0
          %643 = vst [vmem:[%s262] sm:$0xff] %v627
          %644 = vst [vmem:[%s262 + $0x8] sm:$0xff] %v628
          %645 = vst [vmem:[%s262 + $0x10] sm:$0xff] %v629
          %646 = vst [vmem:[%s262 + $0x18] sm:$0xff] %v630
          %647 = vst [vmem:[%s262 + $0x20] sm:$0xff] %v631
          %648 = vst [vmem:[%s262 + $0x28] sm:$0xff] %v632
          %649 = vst [vmem:[%s262 + $0x30] sm:$0xff] %v633
          %650 = vst [vmem:[%s262 + $0x38] sm:$0xff] %v634
          %651 = vst [vmem:[%s262 + $0x40] sm:$0xff] %v635
          %652 = vst [vmem:[%s262 + $0x48] sm:$0xff] %v636
          %653 = vst [vmem:[%s262 + $0x50] sm:$0xff] %v637
          %654 = vst [vmem:[%s262 + $0x58] sm:$0xff] %v638
          %655 = vst [vmem:[%s262 + $0x60] sm:$0xff] %v639
          %656 = vst [vmem:[%s262 + $0x68] sm:$0xff] %v640
          %657 = vst [vmem:[%s262 + $0x70] sm:$0xff] %v641
          %658 = vst [vmem:[%s262 + $0x78] sm:$0xff] %v642
        $region52: #{tpu_custom_call.1} parent=31 // pred_fallthru
          _
        %s659 = sand.u32 %s116, 1
        %s660 = scalar_lea.sflag [#allocation4], %s659
        %s661 = sand.u32 %s116, 1
        %s662 = smul.addr %s661, 128
        %s663 = scalar_lea.vmem [#allocation8], %s662
        // Predicated region
        $region53: #{tpu_custom_call.1} parent=31 // pred_check
          %p664 = pneg %p126
        $region54: #{tpu_custom_call.1} parent=31 // pred_check_branch
          %666 = sbr.rel (%p664) target = $region56
        $region55: #{tpu_custom_call.1} parent=31 // pred_region
          %s667 = smul.u32 16, %s25
          %669 = vsyncadd %s660, 0
          %s670 = smul.addr %s667, 8
          %s671 = scalar_lea.hbm %s3, %s670
          %s672 = sshll.u32 %s663, 4
          %s673 = int_to_ptr.vmem [resolvable:$true] %s672
          %s674 = sshll.u32 %s671, 4
          %s675 = int_to_ptr.hbm [resolvable:$true] %s674
          %680 = dma.vmem_to_hbm [thread:$0]  %s673, 2048, %s675, %s660, 128, 128, 8
        $region56: #{tpu_custom_call.1} parent=31 // pred_fallthru
          _
      $region32: #{tpu_custom_call.1} parent=5 // pred_fallthru
        _
      %p681 = scmp.le.s32.totalorder 2, %s16
      // Predicated region
      $region57: #{tpu_custom_call.1} parent=5 // pred_check
        %p682 = pneg %p681
      $region58: #{tpu_custom_call.1} parent=5 // pred_check_branch
        %684 = sbr.rel (%p682) target = $region60
      $region59: #{tpu_custom_call.1} parent=5 // pred_region
        %s685 = ssub.s32 %s16, 2
        // Predicated region
        $region61: #{tpu_custom_call.1} parent=59 // pred_check
          %p686 = pneg %p132
        $region62: #{tpu_custom_call.1} parent=59 // pred_check_branch
          %688 = sbr.rel (%p686) target = $region64
        $region63: #{tpu_custom_call.1} parent=59 // pred_region
          %s689 = sand.u32 %s117, 1
          %s690 = scalar_lea.sflag [#allocation4], %s689
          %s691 = sand.u32 %s117, 1
          %s692 = smul.addr %s691, 128
          %s693 = scalar_lea.vmem [#allocation8], %s692
          %695 = dma.done %s690, 2048
        $region64: #{tpu_custom_call.1} parent=59 // pred_fallthru
          _
      $region60: #{tpu_custom_call.1} parent=5 // pred_fallthru
        _
    $region6: #{tpu_custom_call.1} parent=1 // loop_footer
      %s20 = sadd.s32 1, %s16
    $region7: #{tpu_custom_call.1} parent=1 // loop_footer_branch
      %15 = sbr.rel target = $region3
    $region8: #{tpu_custom_call.1} parent=1 // loop_exit
      _
    %696 = vsyncpa [#allocation3], 1
    %s697 = scalar_lea.sflag [#allocation3], 1
    %698 = vsyncpa %s697, 1
    %699 = vsyncpa [#allocation6], 1
    %700 = vsyncpa [#allocation4], 1
    %s701 = scalar_lea.sflag [#allocation4], 1
    %702 = vsyncpa %s701, 1

</llo_original>
